<compile_context>
chip_gen: v7x
topology: tpu7x:2x2x1
jax: 0.10.0
libtpu: 0.0.40
codegen_flags: <defaults>
</compile_context>

<pallas_src>
import functools

import jax
import jax.numpy as jnp
from jax import lax
from jax.experimental import pallas as pl
from jax.experimental.pallas import tpu as pltpu


_VMEM_INPUT_BUDGET = 24 * 1024 * 1024   # bytes for the double-buffered input blocks
_VMEM_LIMIT_BYTES = 40 * 1024 * 1024    # scoped VMEM limit (fits v7x's 64 MiB physical)
_MAX_UNROLL_CHUNKS = 32                 # cap on unrolled 128-lane partial sums


def _round_up(x, m):
    return ((x + m - 1) // m) * m


def _row_sum_f32(x):
    """Sum over the last axis in f32, doing most of the work on the VPU.

    Lane-aligned 128-wide column slices are accumulated with elementwise adds
    (VALU); only the final (rows, 128) partial goes through the cross-lane
    (XLU) reduction. The slices are whole-vreg selections (no relayout).
    """
    x = x.astype(jnp.float32)
    cols = x.shape[-1]
    nchunks = cols // 128
    if cols % 128 != 0 or nchunks <= 1 or nchunks > _MAX_UNROLL_CHUNKS:
        return jnp.sum(x, axis=-1, keepdims=True)
    partial = x[:, 0:128]
    for c in range(1, nchunks):
        partial = partial + x[:, c * 128:(c + 1) * 128]
    return jnp.sum(partial, axis=-1, keepdims=True)


def _gap_single_kernel(x_ref, o_ref, *, inv_hw):
    # x_ref: (row_tile, H*W) block ; o_ref: (row_tile, 1). Single reduction pass.
    s = _row_sum_f32(x_ref[...])
    o_ref[...] = (s * inv_hw).astype(o_ref.dtype)


def _gap_accum_kernel(x_ref, o_ref, acc_ref, *, hw, hw_tile, inv_hw):
    # x_ref: (row_tile, hw_tile) ; o_ref: (row_tile, 1) resident across the
    # H*W ("arbitrary") grid axis ; acc_ref: (row_tile, 1) f32 accumulator.
    k = pl.program_id(1)

    @pl.when(k == 0)
    def _init():
        acc_ref[...] = jnp.zeros_like(acc_ref)

    x = x_ref[...].astype(jnp.float32)
    if hw % hw_tile != 0:
        # Ragged final H*W block: out-of-bounds columns hold unspecified data
        # and must not leak into real rows' sums.
        col = lax.broadcasted_iota(jnp.int32, x.shape, 1) + k * hw_tile
        x = jnp.where(col < hw, x, 0.0)
    acc_ref[...] += _row_sum_f32(x)

    @pl.when(k == pl.num_programs(1) - 1)
    def _finish():
        o_ref[...] = (acc_ref[...] * inv_hw).astype(o_ref.dtype)


def _select_tiles(rows, hw, dtype_bytes):
    """Pick (row_tile, hw_tile); hw_tile == hw means a single reduction pass."""
    row_align = 8 * max(1, 4 // dtype_bytes)        # 8 f32, 16 bf16, 32 int8/fp8
    rows_cap = min(1024, _round_up(rows, row_align))

    def fits(rt, hwt):
        return 2 * rt * hwt * dtype_bytes <= _VMEM_INPUT_BUDGET

    # Path 1: full-H*W blocks; take the largest row tile that fits the budget.
    rt = rows_cap
    while rt > row_align and not fits(rt, hw):
        rt = max(row_align, _round_up(rt // 2, row_align))
    if fits(rt, hw) and (rt >= 256 or rt == rows_cap):
        return rt, hw

    # Path 2 (large feature maps / small VMEM, e.g. v7x): keep the row tile
    # large and add a reduction grid axis over H*W (multiples of 128 lanes).
    rt = min(512, rows_cap)
    hwt = _round_up(hw, 128)
    while hwt > 128 and not fits(rt, hwt):
        hwt = max(128, _round_up(hwt // 2, 128))
    while rt > row_align and not fits(rt, hwt):
        rt = max(row_align, _round_up(rt // 2, row_align))
    return rt, hwt


def global_avg_pool2d(x, *, row_tile=None, hw_tile=None):
    """Global average pooling: (N, C, H, W) -> (N, C, 1, 1), mean over H, W.

    row_tile / hw_tile override the automatic, VMEM-budgeted tile selection
    (row_tile must be a multiple of the sublane packing, hw_tile a multiple of
    128 or >= H*W). Mostly useful for testing the accumulator path.
    """
    N, C, H, W = x.shape
    hw = H * W
    rows = N * C
    dtype_bytes = jnp.dtype(x.dtype).itemsize

    auto_rt, auto_hwt = _select_tiles(rows, hw, dtype_bytes)
    rt = auto_rt if row_tile is None else row_tile
    hwt = auto_hwt if hw_tile is None else hw_tile

    x2d = x.reshape(rows, hw)               # metadata-only reshape, no HBM copy
    inv_hw = 1.0 / float(hw)
    grid_rows = pl.cdiv(rows, rt)

    # Memory-bound: one pass over the input, ~one add per element.
    cost = pl.CostEstimate(
        flops=rows * hw,
        transcendentals=0,
        bytes_accessed=rows * hw * dtype_bytes + rows * dtype_bytes,
    )

    if hwt >= hw:
        # Single reduction pass per row tile; ragged last row block is handled
        # by Pallas boundary-block masking (no host-side pad).
        out = pl.pallas_call(
            functools.partial(_gap_single_kernel, inv_hw=inv_hw),
            out_shape=jax.ShapeDtypeStruct((rows, 1), x.dtype),
            grid_spec=pltpu.PrefetchScalarGridSpec(
                num_scalar_prefetch=0,
                grid=(grid_rows,),
                in_specs=[pl.BlockSpec((rt, hw), lambda i: (i, 0))],
                out_specs=pl.BlockSpec((rt, 1), lambda i: (i, 0)),
            ),
            compiler_params=pltpu.CompilerParams(
                dimension_semantics=("parallel",),
                vmem_limit_bytes=_VMEM_LIMIT_BYTES,
            ),
            cost_estimate=cost,
        )(x2d)
    else:
        # Two-axis grid: rows "parallel", H*W reduction with resident accumulator.
        grid_hw = pl.cdiv(hw, hwt)
        out = pl.pallas_call(
            functools.partial(_gap_accum_kernel, hw=hw, hw_tile=hwt, inv_hw=inv_hw),
            out_shape=jax.ShapeDtypeStruct((rows, 1), x.dtype),
            grid_spec=pltpu.PrefetchScalarGridSpec(
                num_scalar_prefetch=0,
                grid=(grid_rows, grid_hw),
                in_specs=[pl.BlockSpec((rt, hwt), lambda i, k: (i, k))],
                out_specs=pl.BlockSpec((rt, 1), lambda i, k: (i, 0)),
                scratch_shapes=[pltpu.VMEM((rt, 1), jnp.float32)],
            ),
            compiler_params=pltpu.CompilerParams(
                dimension_semantics=("parallel", "arbitrary"),
                vmem_limit_bytes=_VMEM_LIMIT_BYTES,
            ),
            cost_estimate=cost,
        )(x2d)

    # NOTE: the (rows, 1) output block lowers to masked stores, but output
    # traffic is 1/hw of input traffic, so lane-dense output rework is skipped.
    return out.reshape(N, C, 1, 1)


if __name__ == "__main__":
    key = jax.random.PRNGKey(0)

    # Primary shape implied by the module spec.
    N, C, H, W = 2, 4, 16, 16
    x = jax.random.normal(key, (N, C, H, W), dtype=jnp.float32)
    y = global_avg_pool2d(x)
    jax.block_until_ready(y)
    y_ref = jnp.mean(x, axis=(2, 3), keepdims=True)
    assert y.shape == (N, C, 1, 1), y.shape
    assert jnp.allclose(y, y_ref, atol=1e-5, rtol=1e-5)

    # Ragged rows + forced H*W-split path: exercises masked boundary blocks
    # (rows=3 with an 8-row tile) and the resident-accumulator kernel with a
    # ragged last H*W tile (130 cols, 128-wide hw tiles).
    x2 = jax.random.normal(jax.random.PRNGKey(0), (1, 3, 10, 13), dtype=jnp.float32)
    y2 = global_avg_pool2d(x2, row_tile=8, hw_tile=128)
    jax.block_until_ready(y2)
    y2_ref = jnp.mean(x2, axis=(2, 3), keepdims=True)
    assert y2.shape == (1, 3, 1, 1), y2.shape
    assert jnp.allclose(y2, y2_ref, atol=1e-5, rtol=1e-5)

    print("KERNEL_OK")
</pallas_src>

<mosaic_0001>
module attributes {stable_mosaic.version = 11 : i64} {
  func.func @_gap_single_kernel(%arg0: i32, %arg1: memref<8x256xf32, #tpu.memory_space<vmem>>, %arg2: memref<8x1xf32, #tpu.memory_space<vmem>>) attributes {dimension_semantics = [#tpu.dimension_semantics<parallel>], iteration_bounds = array<i64: 1>, scalar_prefetch = 0 : i64, scratch_operands = 0 : i64, tpu.core_type = #tpu.core_type<tc>, window_params = [{transform_indices = @transform_0, window_bounds = array<i64: 8, 256>}, {transform_indices = @transform_1, window_bounds = array<i64: 8, 1>}]} {
    %c0 = arith.constant 0 : index
    %c0_0 = arith.constant 0 : index
    %0 = vector.load %arg1[%c0, %c0_0] : memref<8x256xf32, #tpu.memory_space<vmem>>, vector<8x256xf32>
    %1 = vector.extract_strided_slice %0 {offsets = [0, 0], sizes = [8, 128], strides = [1, 1]} : vector<8x256xf32> to vector<8x128xf32>
    %2 = vector.extract_strided_slice %0 {offsets = [0, 128], sizes = [8, 128], strides = [1, 1]} : vector<8x256xf32> to vector<8x128xf32>
    %3 = arith.addf %1, %2 : vector<8x128xf32>
    %cst = arith.constant dense<0.000000e+00> : vector<8xf32>
    %4 = vector.multi_reduction <add>, %3, %cst [1] : vector<8x128xf32> to vector<8xf32>
    %5 = vector.shape_cast %4 : vector<8xf32> to vector<8x1xf32>
    %cst_1 = arith.constant 3.906250e-03 : f32
    %6 = vector.broadcast %cst_1 : f32 to vector<8x1xf32>
    %7 = arith.mulf %5, %6 : vector<8x1xf32>
    %c0_2 = arith.constant 0 : index
    %c0_3 = arith.constant 0 : index
    %8 = vector.load %arg2[%c0_2, %c0_3] : memref<8x1xf32, #tpu.memory_space<vmem>>, vector<8x1xf32>
    tpu.vector_store %arg2[%c0_2, %c0_3], %7 {strides = array<i32>} : memref<8x1xf32, #tpu.memory_space<vmem>>, vector<8x1xf32>,
    return
  }
  func.func @transform_0(%arg0: i32) -> (i32, i32) {
    %c0_i32 = arith.constant 0 : i32
    %c0_i32_0 = arith.constant 0 : i32
    return %arg0, %c0_i32 : i32, i32
  }
  func.func @transform_1(%arg0: i32) -> (i32, i32) {
    %c0_i32 = arith.constant 0 : i32
    %c0_i32_0 = arith.constant 0 : i32
    return %arg0, %c0_i32 : i32, i32
  }
}

</mosaic_0001>

<llo_original>
// kernel: tpu_custom_call.1
$region0: #{tpu_custom_call.1}
  #allocation0 [shape = 'u32[]', space=smem, size = 0x4, offset = 0x4, fixed_abs, tag = 'smem constant byte address 0x4 - core index']
  #allocation1 [shape = 'u32[144,128]{1,0:T(1,128)}', space=vmem, size = 0x12000, scoped, tag = 'internal scratch']
  %s0 = inlined_call_operand.hbm [shape: f32[8,256], index: 0, kind: input, shape index: {}]
  %s1 = inlined_call_operand.vmem [shape: f32[8,1], index: 1, kind: output, shape index: {}]
  %s2 = sld [smem:[#allocation0]]
  $region18: #{tpu_custom_call.1} parent=0
    _
  %s4 = ssub.s32 1, %s2
  %s5 = scalar_select 0, %s4, %s2
  $region1: #{tpu_custom_call.1} parent=0
    #allocation2 [shape = 'u8[8192]{0}', space=vmem, size = 0x2000, scoped, tag = 'input window, operand 0, single buffered']
    #allocation3 [shape = 's32[1]{0}', space=sflag, size = 0x4, scoped, tag = 'scoped memory for tpu_custom_call.1']
    %6 = vsyncpa [#allocation3], 0
    // Predicated region
    $region2: #{tpu_custom_call.1} parent=1 // pred_check
      _
    $region3: #{tpu_custom_call.1} parent=1 // pred_check_branch
      %8 = sbr.rel (0) target = $region5
    $region4: #{tpu_custom_call.1} parent=1 // pred_region
      %s10 = ssub.s32 256, 256
      %11 = vsyncadd [#allocation3], %s10
      %s13 = sshll.u32 [#allocation2], 4
      %s14 = int_to_ptr.vmem [resolvable:$true] %s13
      %16 = dma.hbm_to_vmem [thread:$0]  %s0, 256, %s14, [#allocation3]
    $region5: #{tpu_custom_call.1} parent=1 // pred_fallthru
      _
    // Predicated region
    $region6: #{tpu_custom_call.1} parent=1 // pred_check
      _
    $region7: #{tpu_custom_call.1} parent=1 // pred_check_branch
      %18 = sbr.rel (0) target = $region9
    $region8: #{tpu_custom_call.1} parent=1 // pred_region
      %19 = dma.done [#allocation3], 256
    $region9: #{tpu_custom_call.1} parent=1 // pred_fallthru
      _
    %v20 = vld [vmem:[#allocation2] sm:$0xff]
    %v21 = vld [vmem:[#allocation2 + $0x8] sm:$0xff]
    %v22 = vadd.f32 %v20, %v21
    %23 = vadd.xlane.f32.xlu0 %v22
    %v24 = vpop.xlane.xlu0 %23
    %v25 = vmul.f32 %v24, 0.00390625
    %vm26 = vcmask 7168
    %27 = vst.msk [vmem:[%s1] sm:$0xff] %vm26, %v25
    // Predicated region
    $region10: #{tpu_custom_call.1} parent=1 // pred_check
      _
    $region11: #{tpu_custom_call.1} parent=1 // pred_check_branch
      %29 = sbr.rel (0) target = $region13
    $region12: #{tpu_custom_call.1} parent=1 // pred_region
      _
    $region13: #{tpu_custom_call.1} parent=1 // pred_fallthru
      _
    // Predicated region
    $region14: #{tpu_custom_call.1} parent=1 // pred_check
      _
    $region15: #{tpu_custom_call.1} parent=1 // pred_check_branch
      %31 = sbr.rel (0) target = $region17
    $region16: #{tpu_custom_call.1} parent=1 // pred_region
      _
    $region17: #{tpu_custom_call.1} parent=1 // pred_fallthru
      _
    %32 = vsyncpa [#allocation3], 1

</llo_original>
